<compile_context>
chip_gen: v5e
topology: v5e:2x2
jax: 0.10.0
libtpu: 0.0.40
codegen_flags: <defaults>
</compile_context>

<pallas_src>
import jax
import jax.numpy as jnp
import numpy as np
from jax.experimental import pallas as pl
from jax.experimental.pallas import tpu as pltpu

# ----------------------- configuration (small synthetic cfg) -----------------------
B = 2              # batch
C_IN = 128         # conv8 input channels (fixed by the module)
H = W = 16         # feature-map spatial size (= img_size / fea_stride)
NC = 5             # cfg.num_classes
H2, W2 = H // 2, W // 2
HW = H * W
P2 = H2 * W2
FC9_IN = NC * P2   # num_classes * (img_w/stride) * (img_h/stride)
FC9_OUT = 128
FC10_OUT = NC - 1


# ---------- fused kernel: conv1x1 + softmax + avgpool + flatten + fc9/relu + fc10/sigmoid ----
def exist_head_kernel(x_ref, wct_ref, bc_ref, pmatt_ref, w9_ref, b9_ref,
                      w10_ref, b10_ref, o_ref):
    # x_ref:     (B, C_IN, H*W)   bf16  NCHW with spatial dims flattened (free reshape)
    # wct_ref:   (NC, C_IN)       bf16  1x1 conv weight, PyTorch (out, in) orientation
    # bc_ref:    (NC, 1)          f32   conv bias
    # pmatt_ref: (H*W, H2*W2)     bf16  2x2 average-pool matrix (0.25 entries, exact in bf16)
    # w9_ref:    (NC*H2*W2, 128)  bf16  fc9 weight (flat, PyTorch flatten order)
    # b9_ref:    (1, 128)         f32
    # w10_ref:   (128, NC-1)      f32
    # b10_ref:   (1, NC-1)        f32
    # o_ref:     (B, NC-1)        f32
    wct = wct_ref[...]

    # --- 1x1 conv: both batches written side-by-side on the lane axis -> (NC, B*HW) f32.
    s = jnp.concatenate(
        [jnp.dot(wct, x_ref[b].astype(jnp.bfloat16),
                 preferred_element_type=jnp.float32) for b in range(B)],
        axis=1) + bc_ref[...]

    # --- softmax over the channel (sublane) axis; batches stay separate on lanes.
    #     Elementwise math kept in f32 (v5e-friendly); approx reciprocal only here.
    s = s - jnp.max(s, axis=0, keepdims=True)
    e = jnp.exp(s)
    p = (e * pl.reciprocal(jnp.sum(e, axis=0, keepdims=True), approx=True)
         ).astype(jnp.bfloat16)                                  # (NC, B*HW) bf16

    # --- 2x2 average pooling as one lane-dense matmul per batch (128-aligned lane slices),
    #     then flatten to PyTorch NCHW order: channel row c -> lanes [c*P2, (c+1)*P2).
    pmatt = pmatt_ref[...]
    flats = []
    for b in range(B):
        pooled = jnp.dot(p[:, b * HW:(b + 1) * HW], pmatt,
                         preferred_element_type=jnp.float32)     # (NC, P2) f32
        flats.append(jnp.concatenate(
            [pooled[c:c + 1, :] for c in range(NC)], axis=1))    # (1, NC*P2)
    flat = jnp.concatenate(flats, axis=0)                        # (B, NC*P2) = (2, 320)

    # --- fc9 + ReLU: single (B, 320) @ (320, 128) matmul, f32 accumulation.
    h = jnp.dot(flat.astype(jnp.bfloat16), w9_ref[...],
                preferred_element_type=jnp.float32) + b9_ref[...]
    h = jnp.maximum(h, 0.0)

    # --- fc10 + exact sigmoid (tiny output; exact reciprocal is free), single store.
    z = jnp.dot(h, w10_ref[...], preferred_element_type=jnp.float32) + b10_ref[...]
    o_ref[...] = pl.reciprocal(1.0 + jnp.exp(-z), approx=False)


def exist_head_forward(x_nchw, kernel_params):
    """kernel_params: output of prepare_params(); x_nchw: (B, C_IN, H, W), ideally bf16."""
    wct, bc, pmatt, w9, b9, w10, b10 = kernel_params
    # Dropout2d(0.1) is identity at inference time.
    # NCHW is consumed directly; flattening (H, W) is a free contiguous reshape.
    x_bcp = x_nchw.reshape(B, C_IN, HW)
    vmem = pl.BlockSpec(memory_space=pltpu.MemorySpace.VMEM)
    return pl.pallas_call(
        exist_head_kernel,
        out_shape=jax.ShapeDtypeStruct((B, FC10_OUT), jnp.float32),
        in_specs=[vmem] * 8,
        out_specs=vmem,
    )(x_bcp, wct, bc, pmatt, w9, b9, w10, b10)


# ----------------------- parameter construction / prep -----------------------
def make_params(key):
    k1, k2, k3, k4, k5, k6 = jax.random.split(key, 6)
    wct = jax.random.normal(k1, (NC, C_IN), jnp.float32) * 0.05   # conv8 weight (out, in)
    bc = jax.random.normal(k2, (NC, 1), jnp.float32) * 0.05       # conv8 bias
    w9 = jax.random.normal(k3, (FC9_IN, FC9_OUT), jnp.float32) * 0.05
    b9 = jax.random.normal(k4, (1, FC9_OUT), jnp.float32) * 0.05
    w10 = jax.random.normal(k5, (FC9_OUT, FC10_OUT), jnp.float32) * 0.05
    b10 = jax.random.normal(k6, (1, FC10_OUT), jnp.float32) * 0.05
    # 2x2 average-pool matrix, already transposed: (H*W, H2*W2), 0.25 weights.
    pmatt = np.zeros((HW, P2), dtype=np.float32)
    for h2 in range(H2):
        for w2 in range(W2):
            r = h2 * W2 + w2
            for dh in range(2):
                for dw in range(2):
                    pmatt[(2 * h2 + dh) * W + (2 * w2 + dw), r] = 0.25
    return (wct, bc, jnp.asarray(pmatt), w9, b9, w10, b10)


def prepare_params(params):
    """One-time prep into the kernel-friendly layout/dtypes (no per-call relayout ops)."""
    wct, bc, pmatt, w9, b9, w10, b10 = params
    # bf16 matmul operands (f32 accumulation in-kernel): conv weight, pool matrix (0.25 is
    # exact in bf16) and the flat fc9 weight (largest parameter -> halves its DMA bytes).
    return (wct.astype(jnp.bfloat16), bc, pmatt.astype(jnp.bfloat16),
            w9.astype(jnp.bfloat16), b9, w10, b10)


# ----------------------- pure-JAX f32 reference for validation -----------------------
def exist_head_reference(x_nchw, params):
    wct, bc, _, w9, b9, w10, b10 = params
    x = jnp.einsum("bchw,nc->bnhw", x_nchw, wct) + bc.reshape(1, NC, 1, 1)
    x = jax.nn.softmax(x, axis=1)
    x = x.reshape(B, NC, H2, 2, W2, 2).mean(axis=(3, 5))    # avg_pool2d(2, stride=2)
    x = x.reshape(B, FC9_IN)                                 # PyTorch NCHW flatten
    x = jnp.maximum(x @ w9 + b9.reshape(-1), 0.0)
    return jax.nn.sigmoid(x @ w10 + b10.reshape(-1))


if __name__ == "__main__":
    key = jax.random.PRNGKey(0)
    kx, kp = jax.random.split(key)
    x = jax.random.normal(kx, (B, C_IN, H, W), jnp.float32)
    # The producing layer is assumed to emit bf16 activations (review item: carry x in bf16
    # so its HBM DMA is halved and the MXU gets its native dtype).
    x_bf16 = x.astype(jnp.bfloat16)

    params = make_params(kp)
    kparams = prepare_params(params)

    out = exist_head_forward(x_bf16, kparams)
    out = jax.block_until_ready(out)

    # Reference computed in f32 on the same (bf16-rounded) input so the comparison isolates
    # kernel error (bf16 matmul operands + approx softmax reciprocal).
    ref = exist_head_reference(x_bf16.astype(jnp.float32), params)
    assert out.shape == (B, FC10_OUT), out.shape
    np.testing.assert_allclose(np.asarray(out), np.asarray(ref), rtol=2e-2, atol=2e-2)

    print("KERNEL_OK")
</pallas_src>

<mosaic_0001>
module attributes {stable_mosaic.version = 11 : i64} {
  func.func @exist_head_kernel(%arg0: memref<2x128x256xbf16, #tpu.memory_space<vmem>>, %arg1: memref<5x128xbf16, #tpu.memory_space<vmem>>, %arg2: memref<5x1xf32, #tpu.memory_space<vmem>>, %arg3: memref<256x64xbf16, #tpu.memory_space<vmem>>, %arg4: memref<320x128xbf16, #tpu.memory_space<vmem>>, %arg5: memref<1x128xf32, #tpu.memory_space<vmem>>, %arg6: memref<128x4xf32, #tpu.memory_space<vmem>>, %arg7: memref<1x4xf32, #tpu.memory_space<vmem>>, %arg8: memref<2x4xf32, #tpu.memory_space<vmem>>) attributes {dimension_semantics = [], scalar_prefetch = 0 : i64, scratch_operands = 0 : i64, tpu.core_type = #tpu.core_type<tc>} {
    %c0 = arith.constant 0 : index
    %c0_0 = arith.constant 0 : index
    %0 = vector.load %arg1[%c0, %c0_0] : memref<5x128xbf16, #tpu.memory_space<vmem>>, vector<5x128xbf16>
    %c0_1 = arith.constant 0 : index
    %c0_2 = arith.constant 0 : index
    %c0_3 = arith.constant 0 : index
    %1 = vector.load %arg0[%c0_1, %c0_2, %c0_3] : memref<2x128x256xbf16, #tpu.memory_space<vmem>>, vector<1x128x256xbf16>
    %2 = vector.shape_cast %1 : vector<1x128x256xbf16> to vector<128x256xbf16>
    %cst = arith.constant dense<0.000000e+00> : vector<5x256xf32>
    %3 = tpu.matmul %0, %2, %cst {dimension_numbers = #tpu.dot_dimension_numbers<[1], [0], [0], [1], [0, 0, 1, 1], [], []>} : vector<5x128xbf16>, vector<128x256xbf16>, vector<5x256xf32> -> vector<5x256xf32>
    %c1 = arith.constant 1 : index
    %c0_4 = arith.constant 0 : index
    %c0_5 = arith.constant 0 : index
    %4 = vector.load %arg0[%c1, %c0_4, %c0_5] : memref<2x128x256xbf16, #tpu.memory_space<vmem>>, vector<1x128x256xbf16>
    %5 = vector.shape_cast %4 : vector<1x128x256xbf16> to vector<128x256xbf16>
    %cst_6 = arith.constant dense<0.000000e+00> : vector<5x256xf32>
    %6 = tpu.matmul %0, %5, %cst_6 {dimension_numbers = #tpu.dot_dimension_numbers<[1], [0], [0], [1], [0, 0, 1, 1], [], []>} : vector<5x128xbf16>, vector<128x256xbf16>, vector<5x256xf32> -> vector<5x256xf32>
    %7 = tpu.concatenate %3, %6 in 1 : vector<5x256xf32>, vector<5x256xf32> -> vector<5x512xf32>
    %c0_7 = arith.constant 0 : index
    %c0_8 = arith.constant 0 : index
    %8 = vector.load %arg2[%c0_7, %c0_8] : memref<5x1xf32, #tpu.memory_space<vmem>>, vector<5x1xf32>
    %9 = vector.broadcast %8 : vector<5x1xf32> to vector<5x512xf32>
    %10 = arith.addf %7, %9 : vector<5x512xf32>
    %cst_9 = arith.constant dense<0xFF800000> : vector<512xf32>
    %11 = vector.multi_reduction <maximumf>, %10, %cst_9 [0] : vector<5x512xf32> to vector<512xf32>
    %12 = vector.shape_cast %11 : vector<512xf32> to vector<1x512xf32>
    %13 = vector.broadcast %12 : vector<1x512xf32> to vector<5x512xf32>
    %14 = arith.subf %10, %13 : vector<5x512xf32>
    %15 = math.exp %14 : vector<5x512xf32>
    %cst_10 = arith.constant dense<0.000000e+00> : vector<512xf32>
    %16 = vector.multi_reduction <add>, %15, %cst_10 [0] : vector<5x512xf32> to vector<512xf32>
    %17 = vector.shape_cast %16 : vector<512xf32> to vector<1x512xf32>
    %18 = tpu.reciprocal %17 {approx = true} : vector<1x512xf32> -> vector<1x512xf32>
    %19 = vector.broadcast %18 : vector<1x512xf32> to vector<5x512xf32>
    %20 = arith.mulf %15, %19 : vector<5x512xf32>
    %21 = arith.truncf %20 : vector<5x512xf32> to vector<5x512xbf16>
    %c0_11 = arith.constant 0 : index
    %c0_12 = arith.constant 0 : index
    %22 = vector.load %arg3[%c0_11, %c0_12] : memref<256x64xbf16, #tpu.memory_space<vmem>>, vector<256x64xbf16>
    %23 = vector.extract_strided_slice %21 {offsets = [0, 0], sizes = [5, 256], strides = [1, 1]} : vector<5x512xbf16> to vector<5x256xbf16>
    %cst_13 = arith.constant dense<0.000000e+00> : vector<5x64xf32>
    %24 = tpu.matmul %23, %22, %cst_13 {dimension_numbers = #tpu.dot_dimension_numbers<[1], [0], [0], [1], [0, 0, 1, 1], [], []>} : vector<5x256xbf16>, vector<256x64xbf16>, vector<5x64xf32> -> vector<5x64xf32>
    %25 = vector.extract_strided_slice %24 {offsets = [0, 0], sizes = [1, 64], strides = [1, 1]} : vector<5x64xf32> to vector<1x64xf32>
    %26 = vector.extract_strided_slice %24 {offsets = [1, 0], sizes = [1, 64], strides = [1, 1]} : vector<5x64xf32> to vector<1x64xf32>
    %27 = vector.extract_strided_slice %24 {offsets = [2, 0], sizes = [1, 64], strides = [1, 1]} : vector<5x64xf32> to vector<1x64xf32>
    %28 = vector.extract_strided_slice %24 {offsets = [3, 0], sizes = [1, 64], strides = [1, 1]} : vector<5x64xf32> to vector<1x64xf32>
    %29 = vector.extract_strided_slice %24 {offsets = [4, 0], sizes = [1, 64], strides = [1, 1]} : vector<5x64xf32> to vector<1x64xf32>
    %30 = tpu.concatenate %25, %26, %27, %28, %29 in 1 : vector<1x64xf32>, vector<1x64xf32>, vector<1x64xf32>, vector<1x64xf32>, vector<1x64xf32> -> vector<1x320xf32>
    %31 = vector.extract_strided_slice %21 {offsets = [0, 256], sizes = [5, 256], strides = [1, 1]} : vector<5x512xbf16> to vector<5x256xbf16>
    %cst_14 = arith.constant dense<0.000000e+00> : vector<5x64xf32>
    %32 = tpu.matmul %31, %22, %cst_14 {dimension_numbers = #tpu.dot_dimension_numbers<[1], [0], [0], [1], [0, 0, 1, 1], [], []>} : vector<5x256xbf16>, vector<256x64xbf16>, vector<5x64xf32> -> vector<5x64xf32>
    %33 = vector.extract_strided_slice %32 {offsets = [0, 0], sizes = [1, 64], strides = [1, 1]} : vector<5x64xf32> to vector<1x64xf32>
    %34 = vector.extract_strided_slice %32 {offsets = [1, 0], sizes = [1, 64], strides = [1, 1]} : vector<5x64xf32> to vector<1x64xf32>
    %35 = vector.extract_strided_slice %32 {offsets = [2, 0], sizes = [1, 64], strides = [1, 1]} : vector<5x64xf32> to vector<1x64xf32>
    %36 = vector.extract_strided_slice %32 {offsets = [3, 0], sizes = [1, 64], strides = [1, 1]} : vector<5x64xf32> to vector<1x64xf32>
    %37 = vector.extract_strided_slice %32 {offsets = [4, 0], sizes = [1, 64], strides = [1, 1]} : vector<5x64xf32> to vector<1x64xf32>
    %38 = tpu.concatenate %33, %34, %35, %36, %37 in 1 : vector<1x64xf32>, vector<1x64xf32>, vector<1x64xf32>, vector<1x64xf32>, vector<1x64xf32> -> vector<1x320xf32>
    %39 = tpu.concatenate %30, %38 in 0 : vector<1x320xf32>, vector<1x320xf32> -> vector<2x320xf32>
    %40 = arith.truncf %39 : vector<2x320xf32> to vector<2x320xbf16>
    %c0_15 = arith.constant 0 : index
    %c0_16 = arith.constant 0 : index
    %41 = vector.load %arg4[%c0_15, %c0_16] : memref<320x128xbf16, #tpu.memory_space<vmem>>, vector<320x128xbf16>
    %cst_17 = arith.constant dense<0.000000e+00> : vector<2x128xf32>
    %42 = tpu.matmul %40, %41, %cst_17 {dimension_numbers = #tpu.dot_dimension_numbers<[1], [0], [0], [1], [0, 0, 1, 1], [], []>} : vector<2x320xbf16>, vector<320x128xbf16>, vector<2x128xf32> -> vector<2x128xf32>
    %c0_18 = arith.constant 0 : index
    %c0_19 = arith.constant 0 : index
    %43 = vector.load %arg5[%c0_18, %c0_19] : memref<1x128xf32, #tpu.memory_space<vmem>>, vector<1x128xf32>
    %44 = vector.broadcast %43 : vector<1x128xf32> to vector<2x128xf32>
    %45 = arith.addf %42, %44 : vector<2x128xf32>
    %cst_20 = arith.constant 0.000000e+00 : f32
    %46 = vector.broadcast %cst_20 : f32 to vector<2x128xf32>
    %47 = arith.maximumf %45, %46 : vector<2x128xf32>
    %c0_21 = arith.constant 0 : index
    %c0_22 = arith.constant 0 : index
    %48 = vector.load %arg6[%c0_21, %c0_22] : memref<128x4xf32, #tpu.memory_space<vmem>>, vector<128x4xf32>
    %cst_23 = arith.constant dense<0.000000e+00> : vector<2x4xf32>
    %49 = tpu.matmul %47, %48, %cst_23 {dimension_numbers = #tpu.dot_dimension_numbers<[1], [0], [0], [1], [0, 0, 1, 1], [], []>} : vector<2x128xf32>, vector<128x4xf32>, vector<2x4xf32> -> vector<2x4xf32>
    %c0_24 = arith.constant 0 : index
    %c0_25 = arith.constant 0 : index
    %50 = vector.load %arg7[%c0_24, %c0_25] : memref<1x4xf32, #tpu.memory_space<vmem>>, vector<1x4xf32>
    %51 = vector.broadcast %50 : vector<1x4xf32> to vector<2x4xf32>
    %52 = arith.addf %49, %51 : vector<2x4xf32>
    %cst_26 = arith.constant 0.000000e+00 : f32
    %53 = vector.broadcast %cst_26 : f32 to vector<2x4xf32>
    %54 = arith.subf %53, %52 : vector<2x4xf32>
    %55 = math.exp %54 : vector<2x4xf32>
    %cst_27 = arith.constant 1.000000e+00 : f32
    %56 = vector.broadcast %cst_27 : f32 to vector<2x4xf32>
    %57 = arith.addf %56, %55 : vector<2x4xf32>
    %58 = tpu.reciprocal %57 : vector<2x4xf32> -> vector<2x4xf32>
    %c0_28 = arith.constant 0 : index
    %c0_29 = arith.constant 0 : index
    %59 = vector.load %arg8[%c0_28, %c0_29] : memref<2x4xf32, #tpu.memory_space<vmem>>, vector<2x4xf32>
    tpu.vector_store %arg8[%c0_28, %c0_29], %58 {strides = array<i32>} : memref<2x4xf32, #tpu.memory_space<vmem>>, vector<2x4xf32>,
    return
  }
}

</mosaic_0001>

<llo_original>
// kernel: tpu_custom_call.1
$region0: #{tpu_custom_call.1}
  #allocation0 [shape = 'u32[]', space=smem, size = 0x4, offset = 0x4, fixed_abs, tag = 'smem constant byte address 0x4 - core index']
  #allocation1 [shape = 'u32[72,128]{1,0:T(1,128)}', space=vmem, size = 0x9000, scoped, tag = 'internal scratch']
  %s0 = inlined_call_operand.vmem [shape: bf16[2,128,256], index: 0, kind: input, shape index: {}]
  %s1 = inlined_call_operand.vmem [shape: bf16[5,128], index: 1, kind: input, shape index: {}]
  %s2 = inlined_call_operand.vmem [shape: f32[5,1], index: 2, kind: input, shape index: {}]
  %s3 = inlined_call_operand.vmem [shape: bf16[256,64], index: 3, kind: input, shape index: {}]
  %s4 = inlined_call_operand.hbm [shape: bf16[320,128], index: 4, kind: input, shape index: {}]
  %s5 = inlined_call_operand.vmem [shape: f32[1,128], index: 5, kind: input, shape index: {}]
  %s6 = inlined_call_operand.vmem [shape: f32[128,4], index: 6, kind: input, shape index: {}]
  %s7 = inlined_call_operand.vmem [shape: f32[1,4], index: 7, kind: input, shape index: {}]
  %s8 = inlined_call_operand.hbm [shape: f32[2,4], index: 8, kind: output, shape index: {}]
  %s9 = sld [smem:[#allocation0]]
  $region46: #{tpu_custom_call.1} parent=0
    _
  %s11 = ssub.s32 1, %s9
  %s12 = scalar_select 0, %s11, %s9
  $region1: #{tpu_custom_call.1} parent=0
    #allocation2 [shape = 'u8[81920]{0}', space=vmem, size = 0x14000, scoped, tag = 'input window, operand 4, single buffered']
    #allocation3 [shape = 's32[1]{0}', space=sflag, size = 0x4, scoped, tag = 'scoped memory for tpu_custom_call.1']
    #allocation4 [shape = 's32[1]{0}', space=sflag, size = 0x4, scoped, tag = 'scoped memory for tpu_custom_call.1']
    #allocation5 [shape = 'u8[1024]{0}', space=vmem, size = 0x400, scoped, tag = 'output window, operand 0, single buffered']
    %13 = vsyncpa [#allocation3], 0
    %14 = vsyncpa [#allocation4], 0
    // Predicated region
    $region2: #{tpu_custom_call.1} parent=1 // pred_check
      _
    $region3: #{tpu_custom_call.1} parent=1 // pred_check_branch
      %16 = sbr.rel (0) target = $region5
    $region4: #{tpu_custom_call.1} parent=1 // pred_region
      _
    $region5: #{tpu_custom_call.1} parent=1 // pred_fallthru
      _
    // Predicated region
    $region6: #{tpu_custom_call.1} parent=1 // pred_check
      _
    $region7: #{tpu_custom_call.1} parent=1 // pred_check_branch
      %18 = sbr.rel (0) target = $region9
    $region8: #{tpu_custom_call.1} parent=1 // pred_region
      _
    $region9: #{tpu_custom_call.1} parent=1 // pred_fallthru
      _
    // Predicated region
    $region10: #{tpu_custom_call.1} parent=1 // pred_check
      _
    $region11: #{tpu_custom_call.1} parent=1 // pred_check_branch
      %20 = sbr.rel (0) target = $region13
    $region12: #{tpu_custom_call.1} parent=1 // pred_region
      _
    $region13: #{tpu_custom_call.1} parent=1 // pred_fallthru
      _
    // Predicated region
    $region14: #{tpu_custom_call.1} parent=1 // pred_check
      _
    $region15: #{tpu_custom_call.1} parent=1 // pred_check_branch
      %22 = sbr.rel (0) target = $region17
    $region16: #{tpu_custom_call.1} parent=1 // pred_region
      _
    $region17: #{tpu_custom_call.1} parent=1 // pred_fallthru
      _
    // Predicated region
    $region18: #{tpu_custom_call.1} parent=1 // pred_check
      _
    $region19: #{tpu_custom_call.1} parent=1 // pred_check_branch
      %24 = sbr.rel (0) target = $region21
    $region20: #{tpu_custom_call.1} parent=1 // pred_region
      %26 = vsyncadd [#allocation3], 0
      %s27 = sshll.u32 %s4, 4
      %s28 = int_to_ptr.hbm [resolvable:$true] %s27
      %s29 = sshll.u32 [#allocation2], 4
      %s30 = int_to_ptr.vmem [resolvable:$true] %s29
      %35 = dma.hbm_to_vmem [thread:$0]  %s28, 2560, %s30, [#allocation3], 64, 64, 4
    $region21: #{tpu_custom_call.1} parent=1 // pred_fallthru
      _
    // Predicated region
    $region22: #{tpu_custom_call.1} parent=1 // pred_check
      _
    $region23: #{tpu_custom_call.1} parent=1 // pred_check_branch
      %37 = sbr.rel (0) target = $region25
    $region24: #{tpu_custom_call.1} parent=1 // pred_region
      _
    $region25: #{tpu_custom_call.1} parent=1 // pred_fallthru
      _
    // Predicated region
    $region26: #{tpu_custom_call.1} parent=1 // pred_check
      _
    $region27: #{tpu_custom_call.1} parent=1 // pred_check_branch
      %39 = sbr.rel (0) target = $region29
    $region28: #{tpu_custom_call.1} parent=1 // pred_region
      _
    $region29: #{tpu_custom_call.1} parent=1 // pred_fallthru
      _
    // Predicated region
    $region30: #{tpu_custom_call.1} parent=1 // pred_check
      _
    $region31: #{tpu_custom_call.1} parent=1 // pred_check_branch
      %41 = sbr.rel (0) target = $region33
    $region32: #{tpu_custom_call.1} parent=1 // pred_region
      _
    $region33: #{tpu_custom_call.1} parent=1 // pred_fallthru
      _
    // Predicated region
    $region34: #{tpu_custom_call.1} parent=1 // pred_check
      _
    $region35: #{tpu_custom_call.1} parent=1 // pred_check_branch
      %43 = sbr.rel (0) target = $region37
    $region36: #{tpu_custom_call.1} parent=1 // pred_region
      %45 = dma.done [#allocation3], 2560
    $region37: #{tpu_custom_call.1} parent=1 // pred_fallthru
      _
    %v47 = vld [vmem:[%s1] sm:$0x7]
    %v48 = vld [vmem:[%s0] sm:$0xff]
    %v49 = vld [vmem:[%s0 + $0x8] sm:$0xff]
    %v50 = vld [vmem:[%s0 + $0x10] sm:$0xff]
    %v51 = vld [vmem:[%s0 + $0x18] sm:$0xff]
    %v52 = vld [vmem:[%s0 + $0x20] sm:$0xff]
    %v53 = vld [vmem:[%s0 + $0x28] sm:$0xff]
    %v54 = vld [vmem:[%s0 + $0x30] sm:$0xff]
    %v55 = vld [vmem:[%s0 + $0x38] sm:$0xff]
    %v56 = vld [vmem:[%s0 + $0x40] sm:$0xff]
    %v57 = vld [vmem:[%s0 + $0x48] sm:$0xff]
    %v58 = vld [vmem:[%s0 + $0x50] sm:$0xff]
    %v59 = vld [vmem:[%s0 + $0x58] sm:$0xff]
    %v60 = vld [vmem:[%s0 + $0x60] sm:$0xff]
    %v61 = vld [vmem:[%s0 + $0x68] sm:$0xff]
    %v62 = vld [vmem:[%s0 + $0x70] sm:$0xff]
    %v63 = vld [vmem:[%s0 + $0x78] sm:$0xff]
    %v80 = vunpack.c.l.b16 %v48
    %v81 = vunpack.c.h.b16 %v48
    %v82 = vunpack.c.l.b16 %v49
    %v83 = vunpack.c.h.b16 %v49
    %v84 = vunpack.c.l.b16 %v50
    %v85 = vunpack.c.h.b16 %v50
    %v86 = vunpack.c.l.b16 %v51
    %v87 = vunpack.c.h.b16 %v51
    %v88 = vunpack.c.l.b16 %v52
    %v89 = vunpack.c.h.b16 %v52
    %v90 = vunpack.c.l.b16 %v53
    %v91 = vunpack.c.h.b16 %v53
    %v92 = vunpack.c.l.b16 %v54
    %v93 = vunpack.c.h.b16 %v54
    %v94 = vunpack.c.l.b16 %v55
    %v95 = vunpack.c.h.b16 %v55
    %v96 = vunpack.c.l.b16 %v56
    %v97 = vunpack.c.h.b16 %v56
    %v98 = vunpack.c.l.b16 %v57
    %v99 = vunpack.c.h.b16 %v57
    %v100 = vunpack.c.l.b16 %v58
    %v101 = vunpack.c.h.b16 %v58
    %v102 = vunpack.c.l.b16 %v59
    %v103 = vunpack.c.h.b16 %v59
    %v104 = vunpack.c.l.b16 %v60
    %v105 = vunpack.c.h.b16 %v60
    %v106 = vunpack.c.l.b16 %v61
    %v107 = vunpack.c.h.b16 %v61
    %v108 = vunpack.c.l.b16 %v62
    %v109 = vunpack.c.h.b16 %v62
    %v110 = vunpack.c.l.b16 %v63
    %v111 = vunpack.c.h.b16 %v63
    %v112 = vpack.c.b16 %v82, %v80
    %v113 = vpack.c.b16 %v83, %v81
    %v114 = vpack.c.b16 %v86, %v84
    %v115 = vpack.c.b16 %v87, %v85
    %v116 = vpack.c.b16 %v90, %v88
    %v117 = vpack.c.b16 %v91, %v89
    %v118 = vpack.c.b16 %v94, %v92
    %v119 = vpack.c.b16 %v95, %v93
    %v120 = vpack.c.b16 %v98, %v96
    %v121 = vpack.c.b16 %v99, %v97
    %v122 = vpack.c.b16 %v102, %v100
    %v123 = vpack.c.b16 %v103, %v101
    %v124 = vpack.c.b16 %v106, %v104
    %v125 = vpack.c.b16 %v107, %v105
    %v126 = vpack.c.b16 %v110, %v108
    %v127 = vpack.c.b16 %v111, %v109
    %144 = vmatpush.bf16.msra.mxu0 %v126
    %145 = vmatpush.bf16.msra.mxu0 %v124
    %146 = vmatpush.bf16.msra.mxu0 %v122
    %147 = vmatpush.bf16.msra.mxu0 %v120
    %148 = vmatpush.bf16.msra.mxu0 %v118
    %149 = vmatpush.bf16.msra.mxu0 %v116
    %150 = vmatpush.bf16.msra.mxu0 %v114
    %151 = vmatpush.bf16.msra.mxu0 %v112
    %152 = vmatmul.bf16.gmra.mxu0 %v47
    %v153 = vpop.f32.mrf.mxu0
    %v154 = vadd.f32 0.0, %v153
    %v155 = vpop.f32.mrf.mxu0
    %156 = vdwg.mxu0
    %157 = vmatpush.bf16.msra.mxu0 %v127
    %158 = vmatpush.bf16.msra.mxu0 %v125
    %159 = vmatpush.bf16.msra.mxu0 %v123
    %160 = vmatpush.bf16.msra.mxu0 %v121
    %161 = vmatpush.bf16.msra.mxu0 %v119
    %162 = vmatpush.bf16.msra.mxu0 %v117
    %163 = vmatpush.bf16.msra.mxu0 %v115
    %164 = vmatpush.bf16.msra.mxu0 %v113
    %165 = vmatmul.bf16.gmra.mxu0 %v47
    %v166 = vpop.f32.mrf.mxu0
    %v167 = vadd.f32 0.0, %v166
    %v168 = vpop.f32.mrf.mxu0
    %169 = vdwg.mxu0
    %s170 = scalar_lea.vmem %s0, 128
    %v171 = vld [vmem:[%s170] sm:$0xff]
    %v172 = vld [vmem:[%s170 + $0x8] sm:$0xff]
    %v173 = vld [vmem:[%s170 + $0x10] sm:$0xff]
    %v174 = vld [vmem:[%s170 + $0x18] sm:$0xff]
    %v175 = vld [vmem:[%s170 + $0x20] sm:$0xff]
    %v176 = vld [vmem:[%s170 + $0x28] sm:$0xff]
    %v177 = vld [vmem:[%s170 + $0x30] sm:$0xff]
    %v178 = vld [vmem:[%s170 + $0x38] sm:$0xff]
    %v179 = vld [vmem:[%s170 + $0x40] sm:$0xff]
    %v180 = vld [vmem:[%s170 + $0x48] sm:$0xff]
    %v181 = vld [vmem:[%s170 + $0x50] sm:$0xff]
    %v182 = vld [vmem:[%s170 + $0x58] sm:$0xff]
    %v183 = vld [vmem:[%s170 + $0x60] sm:$0xff]
    %v184 = vld [vmem:[%s170 + $0x68] sm:$0xff]
    %v185 = vld [vmem:[%s170 + $0x70] sm:$0xff]
    %v186 = vld [vmem:[%s170 + $0x78] sm:$0xff]
    %v203 = vunpack.c.l.b16 %v171
    %v204 = vunpack.c.h.b16 %v171
    %v205 = vunpack.c.l.b16 %v172
    %v206 = vunpack.c.h.b16 %v172
    %v207 = vunpack.c.l.b16 %v173
    %v208 = vunpack.c.h.b16 %v173
    %v209 = vunpack.c.l.b16 %v174
    %v210 = vunpack.c.h.b16 %v174
    %v211 = vunpack.c.l.b16 %v175
    %v212 = vunpack.c.h.b16 %v175
    %v213 = vunpack.c.l.b16 %v176
    %v214 = vunpack.c.h.b16 %v176
    %v215 = vunpack.c.l.b16 %v177
    %v216 = vunpack.c.h.b16 %v177
    %v217 = vunpack.c.l.b16 %v178
    %v218 = vunpack.c.h.b16 %v178
    %v219 = vunpack.c.l.b16 %v179
    %v220 = vunpack.c.h.b16 %v179
    %v221 = vunpack.c.l.b16 %v180
    %v222 = vunpack.c.h.b16 %v180
    %v223 = vunpack.c.l.b16 %v181
    %v224 = vunpack.c.h.b16 %v181
    %v225 = vunpack.c.l.b16 %v182
    %v226 = vunpack.c.h.b16 %v182
    %v227 = vunpack.c.l.b16 %v183
    %v228 = vunpack.c.h.b16 %v183
    %v229 = vunpack.c.l.b16 %v184
    %v230 = vunpack.c.h.b16 %v184
    %v231 = vunpack.c.l.b16 %v185
    %v232 = vunpack.c.h.b16 %v185
    %v233 = vunpack.c.l.b16 %v186
    %v234 = vunpack.c.h.b16 %v186
    %v235 = vpack.c.b16 %v205, %v203
    %v236 = vpack.c.b16 %v206, %v204
    %v237 = vpack.c.b16 %v209, %v207
    %v238 = vpack.c.b16 %v210, %v208
    %v239 = vpack.c.b16 %v213, %v211
    %v240 = vpack.c.b16 %v214, %v212
    %v241 = vpack.c.b16 %v217, %v215
    %v242 = vpack.c.b16 %v218, %v216
    %v243 = vpack.c.b16 %v221, %v219
    %v244 = vpack.c.b16 %v222, %v220
    %v245 = vpack.c.b16 %v225, %v223
    %v246 = vpack.c.b16 %v226, %v224
    %v247 = vpack.c.b16 %v229, %v227
    %v248 = vpack.c.b16 %v230, %v228
    %v249 = vpack.c.b16 %v233, %v231
    %v250 = vpack.c.b16 %v234, %v232
    %267 = vmatpush.bf16.msra.mxu0 %v249
    %268 = vmatpush.bf16.msra.mxu0 %v247
    %269 = vmatpush.bf16.msra.mxu0 %v245
    %270 = vmatpush.bf16.msra.mxu0 %v243
    %271 = vmatpush.bf16.msra.mxu0 %v241
    %272 = vmatpush.bf16.msra.mxu0 %v239
    %273 = vmatpush.bf16.msra.mxu0 %v237
    %274 = vmatpush.bf16.msra.mxu0 %v235
    %275 = vmatmul.bf16.gmra.mxu0 %v47
    %v276 = vpop.f32.mrf.mxu0
    %v277 = vadd.f32 0.0, %v276
    %v278 = vpop.f32.mrf.mxu0
    %279 = vdwg.mxu0
    %280 = vmatpush.bf16.msra.mxu0 %v250
    %281 = vmatpush.bf16.msra.mxu0 %v248
    %282 = vmatpush.bf16.msra.mxu0 %v246
    %283 = vmatpush.bf16.msra.mxu0 %v244
    %284 = vmatpush.bf16.msra.mxu0 %v242
    %285 = vmatpush.bf16.msra.mxu0 %v240
    %286 = vmatpush.bf16.msra.mxu0 %v238
    %287 = vmatpush.bf16.msra.mxu0 %v236
    %288 = vmatmul.bf16.gmra.mxu0 %v47
    %v289 = vpop.f32.mrf.mxu0
    %v290 = vadd.f32 0.0, %v289
    %v291 = vpop.f32.mrf.mxu0
    %292 = vdwg.mxu0
    %v293 = vld [vmem:[%s2] sm:$0x1f]
    %295 = vset.pattern.permute.xlu0 0
    %296 = vperm.xlu0 %295, %v293
    %v297 = vpop.permute.xlu0 %296
    %v299 = vadd.f32 %v154, %v297
    %v300 = vadd.f32 %v167, %v297
    %v301 = vadd.f32 %v277, %v297
    %v302 = vadd.f32 %v290, %v297
    %vm303 = vcmask 1044480
    %v304 = vsel %vm303, %v299, -inf
    %v305 = vrot.slane %v304, 4
    %v306 = vmax.f32 %v304, %v305
    %v307 = vrot.slane %v306, 2
    %v308 = vmax.f32 %v306, %v307
    %v309 = vrot.slane %v308, 1
    %v310 = vmax.f32 %v308, %v309
    %v311 = vsel %vm303, %v300, -inf
    %v312 = vrot.slane %v311, 4
    %v313 = vmax.f32 %v311, %v312
    %v314 = vrot.slane %v313, 2
    %v315 = vmax.f32 %v313, %v314
    %v316 = vrot.slane %v315, 1
    %v317 = vmax.f32 %v315, %v316
    %v318 = vsel %vm303, %v301, -inf
    %v319 = vrot.slane %v318, 4
    %v320 = vmax.f32 %v318, %v319
    %v321 = vrot.slane %v320, 2
    %v322 = vmax.f32 %v320, %v321
    %v323 = vrot.slane %v322, 1
    %v324 = vmax.f32 %v322, %v323
    %v325 = vsel %vm303, %v302, -inf
    %v326 = vrot.slane %v325, 4
    %v327 = vmax.f32 %v325, %v326
    %v328 = vrot.slane %v327, 2
    %v329 = vmax.f32 %v327, %v328
    %v330 = vrot.slane %v329, 1
    %v331 = vmax.f32 %v329, %v330
    %v332 = vsub.f32 %v299, %v310
    %v333 = vsub.f32 %v300, %v317
    %v334 = vsub.f32 %v301, %v324
    %v335 = vsub.f32 %v302, %v331
    %v336 = vmul.f32 %v332, 1.442695
    %v337 = vpow.pop %v336
    %v338 = vmul.f32 %v333, 1.442695
    %v339 = vpow.pop %v338
    %v340 = vmul.f32 %v334, 1.442695
    %v341 = vpow.pop %v340
    %v342 = vmul.f32 %v335, 1.442695
    %v343 = vpow.pop %v342
    %v344 = vsel %vm303, %v337, 0.0
    %v345 = vrot.slane %v344, 4
    %v346 = vadd.f32 %v344, %v345
    %v347 = vrot.slane %v346, 2
    %v348 = vadd.f32 %v346, %v347
    %v349 = vrot.slane %v348, 1
    %v350 = vadd.f32 %v348, %v349
    %v351 = vsel %vm303, %v339, 0.0
    %v352 = vrot.slane %v351, 4
    %v353 = vadd.f32 %v351, %v352
    %v354 = vrot.slane %v353, 2
    %v355 = vadd.f32 %v353, %v354
    %v356 = vrot.slane %v355, 1
    %v357 = vadd.f32 %v355, %v356
    %v358 = vsel %vm303, %v341, 0.0
    %v359 = vrot.slane %v358, 4
    %v360 = vadd.f32 %v358, %v359
    %v361 = vrot.slane %v360, 2
    %v362 = vadd.f32 %v360, %v361
    %v363 = vrot.slane %v362, 1
    %v364 = vadd.f32 %v362, %v363
    %v365 = vsel %vm303, %v343, 0.0
    %v366 = vrot.slane %v365, 4
    %v367 = vadd.f32 %v365, %v366
    %v368 = vrot.slane %v367, 2
    %v369 = vadd.f32 %v367, %v368
    %v370 = vrot.slane %v369, 1
    %v371 = vadd.f32 %v369, %v370
    %v372 = vrcp.pop %v350
    %v373 = vrcp.pop %v357
    %v374 = vrcp.pop %v364
    %v375 = vrcp.pop %v371
    %v376 = vmul.f32 %v337, %v372
    %v377 = vmul.f32 %v339, %v373
    %v378 = vmul.f32 %v341, %v374
    %v379 = vmul.f32 %v343, %v375
    %v380 = vpack.c.bf16 %v377, %v376
    %v381 = vpack.c.bf16 %v379, %v378
    %v382 = vld [vmem:[%s3] sm:$0xf]
    %v383 = vld [vmem:[%s3 + $0x4] sm:$0xf]
    %v384 = vld [vmem:[%s3 + $0x8] sm:$0xf]
    %v385 = vld [vmem:[%s3 + $0xc] sm:$0xf]
    %v386 = vld [vmem:[%s3 + $0x10] sm:$0xf]
    %v387 = vld [vmem:[%s3 + $0x14] sm:$0xf]
    %v388 = vld [vmem:[%s3 + $0x18] sm:$0xf]
    %v389 = vld [vmem:[%s3 + $0x1c] sm:$0xf]
    %v390 = vld [vmem:[%s3 + $0x20] sm:$0xf]
    %v391 = vld [vmem:[%s3 + $0x24] sm:$0xf]
    %v392 = vld [vmem:[%s3 + $0x28] sm:$0xf]
    %v393 = vld [vmem:[%s3 + $0x2c] sm:$0xf]
    %v394 = vld [vmem:[%s3 + $0x30] sm:$0xf]
    %v395 = vld [vmem:[%s3 + $0x34] sm:$0xf]
    %v396 = vld [vmem:[%s3 + $0x38] sm:$0xf]
    %v397 = vld [vmem:[%s3 + $0x3c] sm:$0xf]
    %v398 = vld [vmem:[%s3 + $0x40] sm:$0xf]
    %v399 = vld [vmem:[%s3 + $0x44] sm:$0xf]
    %v400 = vld [vmem:[%s3 + $0x48] sm:$0xf]
    %v401 = vld [vmem:[%s3 + $0x4c] sm:$0xf]
    %v402 = vld [vmem:[%s3 + $0x50] sm:$0xf]
    %v403 = vld [vmem:[%s3 + $0x54] sm:$0xf]
    %v404 = vld [vmem:[%s3 + $0x58] sm:$0xf]
    %v405 = vld [vmem:[%s3 + $0x5c] sm:$0xf]
    %v406 = vld [vmem:[%s3 + $0x60] sm:$0xf]
    %v407 = vld [vmem:[%s3 + $0x64] sm:$0xf]
    %v408 = vld [vmem:[%s3 + $0x68] sm:$0xf]
    %v409 = vld [vmem:[%s3 + $0x6c] sm:$0xf]
    %v410 = vld [vmem:[%s3 + $0x70] sm:$0xf]
    %v411 = vld [vmem:[%s3 + $0x74] sm:$0xf]
    %v412 = vld [vmem:[%s3 + $0x78] sm:$0xf]
    %v413 = vld [vmem:[%s3 + $0x7c] sm:$0xf]
    %v415 = vunpack.c.l.b16 %v380
    %v416 = vunpack.c.h.b16 %v380
    %v417 = vpack.c.b16 %v415, %v415
    %v418 = vpack.c.b16 %v416, %v416
    %v453 = vunpack.c.l.b16 %v382
    %v454 = vunpack.c.l.b16 %v383
    %v455 = vunpack.c.l.b16 %v384
    %v456 = vunpack.c.l.b16 %v385
    %v457 = vunpack.c.l.b16 %v386
    %v458 = vunpack.c.l.b16 %v387
    %v459 = vunpack.c.l.b16 %v388
    %v460 = vunpack.c.l.b16 %v389
    %v461 = vunpack.c.l.b16 %v390
    %v462 = vunpack.c.l.b16 %v391
    %v463 = vunpack.c.l.b16 %v392
    %v464 = vunpack.c.l.b16 %v393
    %v465 = vunpack.c.l.b16 %v394
    %v466 = vunpack.c.l.b16 %v395
    %v467 = vunpack.c.l.b16 %v396
    %v468 = vunpack.c.l.b16 %v397
    %v469 = vunpack.c.l.b16 %v398
    %v470 = vunpack.c.l.b16 %v399
    %v471 = vunpack.c.l.b16 %v400
    %v472 = vunpack.c.l.b16 %v401
    %v473 = vunpack.c.l.b16 %v402
    %v474 = vunpack.c.l.b16 %v403
    %v475 = vunpack.c.l.b16 %v404
    %v476 = vunpack.c.l.b16 %v405
    %v477 = vunpack.c.l.b16 %v406
    %v478 = vunpack.c.l.b16 %v407
    %v479 = vunpack.c.l.b16 %v408
    %v480 = vunpack.c.l.b16 %v409
    %v481 = vunpack.c.l.b16 %v410
    %v482 = vunpack.c.l.b16 %v411
    %v483 = vunpack.c.l.b16 %v412
    %v484 = vunpack.c.l.b16 %v413
    %v485 = vpack.c.b16 %v454, %v453
    %v486 = vpack.c.b16 %v456, %v455
    %v487 = vpack.c.b16 %v458, %v457
    %v488 = vpack.c.b16 %v460, %v459
    %v489 = vpack.c.b16 %v462, %v461
    %v490 = vpack.c.b16 %v464, %v463
    %v491 = vpack.c.b16 %v466, %v465
    %v492 = vpack.c.b16 %v468, %v467
    %v493 = vpack.c.b16 %v470, %v469
    %v494 = vpack.c.b16 %v472, %v471
    %v495 = vpack.c.b16 %v474, %v473
    %v496 = vpack.c.b16 %v476, %v475
    %v497 = vpack.c.b16 %v478, %v477
    %v498 = vpack.c.b16 %v480, %v479
    %v499 = vpack.c.b16 %v482, %v481
    %v500 = vpack.c.b16 %v484, %v483
    %517 = vmatpush.bf16.msra.mxu0 %v492
    %518 = vmatpush.bf16.msra.mxu0 %v491
    %519 = vmatpush.bf16.msra.mxu0 %v490
    %520 = vmatpush.bf16.msra.mxu0 %v489
    %521 = vmatpush.bf16.msra.mxu0 %v488
    %522 = vmatpush.bf16.msra.mxu0 %v487
    %523 = vmatpush.bf16.msra.mxu0 %v486
    %524 = vmatpush.bf16.msra.mxu0 %v485
    %525 = vmatmul.bf16.gmra.mxu0 %v417
    %v526 = vpop.f32.mrf.mxu0
    %v527 = vadd.f32 0.0, %v526
    %v528 = vpop.f32.mrf.mxu0
    %529 = vdwg.mxu0
    %530 = vmatpush.bf16.msra.mxu0 %v500
    %531 = vmatpush.bf16.msra.mxu0 %v499
    %532 = vmatpush.bf16.msra.mxu0 %v498
    %533 = vmatpush.bf16.msra.mxu0 %v497
    %534 = vmatpush.bf16.msra.mxu0 %v496
    %535 = vmatpush.bf16.msra.mxu0 %v495
    %536 = vmatpush.bf16.msra.mxu0 %v494
    %537 = vmatpush.bf16.msra.mxu0 %v493
    %538 = vmatmul.bf16.gmra.mxu0 %v418
    %v539 = vpop.f32.mrf.mxu0
    %v540 = vadd.f32 %v527, %v539
    %v541 = vpop.f32.mrf.mxu0
    %542 = vdwg.mxu0
    %v544 = vrot.slane %v540, 1
    %545 = vrot.lane.b32.xlu0 %v544, 64
    %v546 = vpop.permute.xlu0 %545
    %v548 = vrot.slane %v540, 2
    %v550 = vrot.slane %v540, 3
    %551 = vrot.lane.b32.xlu0 %v550, 64
    %v552 = vpop.permute.xlu0 %551
    %v554 = vrot.slane %v540, 4
    %vm556 = vcmask 523264
    %v557 = vsel %vm556, %v540, %v546
    %v558 = vsel %vm556, %v548, %v552
    %v560 = vunpack.c.l.b16 %v381
    %v561 = vunpack.c.h.b16 %v381
    %v562 = vpack.c.b16 %v560, %v560
    %v563 = vpack.c.b16 %v561, %v561
    %566 = vmatpush.bf16.msra.mxu0 %v492
    %567 = vmatpush.bf16.msra.mxu0 %v491
    %568 = vmatpush.bf16.msra.mxu0 %v490
    %569 = vmatpush.bf16.msra.mxu0 %v489
    %570 = vmatpush.bf16.msra.mxu0 %v488
    %571 = vmatpush.bf16.msra.mxu0 %v487
    %572 = vmatpush.bf16.msra.mxu0 %v486
    %573 = vmatpush.bf16.msra.mxu0 %v485
    %574 = vmatmul.bf16.gmra.mxu0 %v562
    %v575 = vpop.f32.mrf.mxu0
    %v576 = vadd.f32 0.0, %v575
    %v577 = vpop.f32.mrf.mxu0
    %578 = vdwg.mxu0
    %579 = vmatpush.bf16.msra.mxu0 %v500
    %580 = vmatpush.bf16.msra.mxu0 %v499
    %581 = vmatpush.bf16.msra.mxu0 %v498
    %582 = vmatpush.bf16.msra.mxu0 %v497
    %583 = vmatpush.bf16.msra.mxu0 %v496
    %584 = vmatpush.bf16.msra.mxu0 %v495
    %585 = vmatpush.bf16.msra.mxu0 %v494
    %586 = vmatpush.bf16.msra.mxu0 %v493
    %587 = vmatmul.bf16.gmra.mxu0 %v563
    %v588 = vpop.f32.mrf.mxu0
    %v589 = vadd.f32 %v576, %v588
    %v590 = vpop.f32.mrf.mxu0
    %591 = vdwg.mxu0
    %v593 = vrot.slane %v589, 1
    %594 = vrot.lane.b32.xlu0 %v593, 64
    %v595 = vpop.permute.xlu0 %594
    %v597 = vrot.slane %v589, 2
    %v599 = vrot.slane %v589, 3
    %600 = vrot.lane.b32.xlu0 %v599, 64
    %v601 = vpop.permute.xlu0 %600
    %v603 = vrot.slane %v589, 4
    %v604 = vsel %vm556, %v589, %v595
    %v605 = vsel %vm556, %v597, %v601
    %v608 = vrot.slane %v604, 7
    %v609 = vrot.slane %v605, 7
    %v610 = vrot.slane %v603, 7
    %vm614 = vcmask 1040384
    %v615 = vsel %vm614, %v557, %v608
    %v616 = vsel %vm614, %v558, %v609
    %v617 = vsel %vm614, %v554, %v610
    %v618 = vpack.c.bf16 %v615, %v615
    %v619 = vpack.c.bf16 %v616, %v616
    %v620 = vpack.c.bf16 %v617, %v617
    %v621 = vld [vmem:[#allocation2] sm:$0xf]
    %v622 = vld [vmem:[#allocation2 + $0x4] sm:$0xf]
    %v623 = vld [vmem:[#allocation2 + $0x8] sm:$0xf]
    %v624 = vld [vmem:[#allocation2 + $0xc] sm:$0xf]
    %v625 = vld [vmem:[#allocation2 + $0x10] sm:$0xf]
    %v626 = vld [vmem:[#allocation2 + $0x14] sm:$0xf]
    %v627 = vld [vmem:[#allocation2 + $0x18] sm:$0xf]
    %v628 = vld [vmem:[#allocation2 + $0x1c] sm:$0xf]
    %v629 = vld [vmem:[#allocation2 + $0x20] sm:$0xf]
    %v630 = vld [vmem:[#allocation2 + $0x24] sm:$0xf]
    %v631 = vld [vmem:[#allocation2 + $0x28] sm:$0xf]
    %v632 = vld [vmem:[#allocation2 + $0x2c] sm:$0xf]
    %v633 = vld [vmem:[#allocation2 + $0x30] sm:$0xf]
    %v634 = vld [vmem:[#allocation2 + $0x34] sm:$0xf]
    %v635 = vld [vmem:[#allocation2 + $0x38] sm:$0xf]
    %v636 = vld [vmem:[#allocation2 + $0x3c] sm:$0xf]
    %v637 = vld [vmem:[#allocation2 + $0x40] sm:$0xf]
    %v638 = vld [vmem:[#allocation2 + $0x44] sm:$0xf]
    %v639 = vld [vmem:[#allocation2 + $0x48] sm:$0xf]
    %v640 = vld [vmem:[#allocation2 + $0x4c] sm:$0xf]
    %v641 = vld [vmem:[#allocation2 + $0x50] sm:$0xf]
    %v642 = vld [vmem:[#allocation2 + $0x54] sm:$0xf]
    %v643 = vld [vmem:[#allocation2 + $0x58] sm:$0xf]
    %v644 = vld [vmem:[#allocation2 + $0x5c] sm:$0xf]
    %v645 = vld [vmem:[#allocation2 + $0x60] sm:$0xf]
    %v646 = vld [vmem:[#allocation2 + $0x64] sm:$0xf]
    %v647 = vld [vmem:[#allocation2 + $0x68] sm:$0xf]
    %v648 = vld [vmem:[#allocation2 + $0x6c] sm:$0xf]
    %v649 = vld [vmem:[#allocation2 + $0x70] sm:$0xf]
    %v650 = vld [vmem:[#allocation2 + $0x74] sm:$0xf]
    %v651 = vld [vmem:[#allocation2 + $0x78] sm:$0xf]
    %v652 = vld [vmem:[#allocation2 + $0x7c] sm:$0xf]
    %v653 = vld [vmem:[#allocation2 + $0x80] sm:$0xf]
    %v654 = vld [vmem:[#allocation2 + $0x84] sm:$0xf]
    %v655 = vld [vmem:[#allocation2 + $0x88] sm:$0xf]
    %v656 = vld [vmem:[#allocation2 + $0x8c] sm:$0xf]
    %v657 = vld [vmem:[#allocation2 + $0x90] sm:$0xf]
    %v658 = vld [vmem:[#allocation2 + $0x94] sm:$0xf]
    %v659 = vld [vmem:[#allocation2 + $0x98] sm:$0xf]
    %v660 = vld [vmem:[#allocation2 + $0x9c] sm:$0xf]
    %v661 = vld [vmem:[%s5] sm:$0x1]
    %v663 = vperm.slane %v661, 0
    %v705 = vunpack.c.l.b16 %v621
    %v706 = vunpack.c.l.b16 %v622
    %v707 = vunpack.c.l.b16 %v623
    %v708 = vunpack.c.l.b16 %v624
    %v709 = vunpack.c.l.b16 %v625
    %v710 = vunpack.c.l.b16 %v626
    %v711 = vunpack.c.l.b16 %v627
    %v712 = vunpack.c.l.b16 %v628
    %v713 = vunpack.c.l.b16 %v629
    %v714 = vunpack.c.l.b16 %v630
    %v715 = vunpack.c.l.b16 %v631
    %v716 = vunpack.c.l.b16 %v632
    %v717 = vunpack.c.l.b16 %v633
    %v718 = vunpack.c.l.b16 %v634
    %v719 = vunpack.c.l.b16 %v635
    %v720 = vunpack.c.l.b16 %v636
    %v721 = vunpack.c.l.b16 %v637
    %v722 = vunpack.c.l.b16 %v638
    %v723 = vunpack.c.l.b16 %v639
    %v724 = vunpack.c.l.b16 %v640
    %v725 = vunpack.c.l.b16 %v641
    %v726 = vunpack.c.l.b16 %v642
    %v727 = vunpack.c.l.b16 %v643
    %v728 = vunpack.c.l.b16 %v644
    %v729 = vunpack.c.l.b16 %v645
    %v730 = vunpack.c.l.b16 %v646
    %v731 = vunpack.c.l.b16 %v647
    %v732 = vunpack.c.l.b16 %v648
    %v733 = vunpack.c.l.b16 %v649
    %v734 = vunpack.c.l.b16 %v650
    %v735 = vunpack.c.l.b16 %v651
    %v736 = vunpack.c.l.b16 %v652
    %v737 = vunpack.c.l.b16 %v653
    %v738 = vunpack.c.l.b16 %v654
    %v739 = vunpack.c.l.b16 %v655
    %v740 = vunpack.c.l.b16 %v656
    %v741 = vunpack.c.l.b16 %v657
    %v742 = vunpack.c.l.b16 %v658
    %v743 = vunpack.c.l.b16 %v659
    %v744 = vunpack.c.l.b16 %v660
    %v745 = vpack.c.b16 %v706, %v705
    %v746 = vpack.c.b16 %v708, %v707
    %v747 = vpack.c.b16 %v710, %v709
    %v748 = vpack.c.b16 %v712, %v711
    %v749 = vpack.c.b16 %v714, %v713
    %v750 = vpack.c.b16 %v716, %v715
    %v751 = vpack.c.b16 %v718, %v717
    %v752 = vpack.c.b16 %v720, %v719
    %v753 = vpack.c.b16 %v722, %v721
    %v754 = vpack.c.b16 %v724, %v723
    %v755 = vpack.c.b16 %v726, %v725
    %v756 = vpack.c.b16 %v728, %v727
    %v757 = vpack.c.b16 %v730, %v729
    %v758 = vpack.c.b16 %v732, %v731
    %v759 = vpack.c.b16 %v734, %v733
    %v760 = vpack.c.b16 %v736, %v735
    %v761 = vpack.c.b16 %v738, %v737
    %v762 = vpack.c.b16 %v740, %v739
    %v763 = vpack.c.b16 %v742, %v741
    %v764 = vpack.c.b16 %v744, %v743
    %v786 = vsel %vm556, %v620, 0
    %788 = vmatpush.bf16.msra.mxu0 %v752
    %789 = vmatpush.bf16.msra.mxu0 %v751
    %790 = vmatpush.bf16.msra.mxu0 %v750
    %791 = vmatpush.bf16.msra.mxu0 %v749
    %792 = vmatpush.bf16.msra.mxu0 %v748
    %793 = vmatpush.bf16.msra.mxu0 %v747
    %794 = vmatpush.bf16.msra.mxu0 %v746
    %795 = vmatpush.bf16.msra.mxu0 %v745
    %796 = vmatmul.bf16.gmra.mxu0 %v618
    %v797 = vpop.f32.mrf.mxu0
    %v798 = vadd.f32 %v663, %v797
    %v799 = vpop.f32.mrf.mxu0
    %800 = vdwg.mxu0
    %801 = vmatpush.bf16.msra.mxu0 %v760
    %802 = vmatpush.bf16.msra.mxu0 %v759
    %803 = vmatpush.bf16.msra.mxu0 %v758
    %804 = vmatpush.bf16.msra.mxu0 %v757
    %805 = vmatpush.bf16.msra.mxu0 %v756
    %806 = vmatpush.bf16.msra.mxu0 %v755
    %807 = vmatpush.bf16.msra.mxu0 %v754
    %808 = vmatpush.bf16.msra.mxu0 %v753
    %809 = vmatmul.bf16.gmra.mxu0 %v619
    %v810 = vpop.f32.mrf.mxu0
    %v811 = vadd.f32 %v798, %v810
    %v812 = vpop.f32.mrf.mxu0
    %813 = vdwg.mxu0
    %814 = vmatpush.bf16.msra.mxu0 0
    %815 = vmatpush.bf16.msra.mxu0 0
    %816 = vmatpush.bf16.msra.mxu0 0
    %817 = vmatpush.bf16.msra.mxu0 0
    %818 = vmatpush.bf16.msra.mxu0 %v764
    %819 = vmatpush.bf16.msra.mxu0 %v763
    %820 = vmatpush.bf16.msra.mxu0 %v762
    %821 = vmatpush.bf16.msra.mxu0 %v761
    %822 = vmatmul.bf16.gmra.mxu0 %v786
    %v823 = vpop.f32.mrf.mxu0
    %v824 = vadd.f32 %v811, %v823
    %v825 = vpop.f32.mrf.mxu0
    %826 = vdwg.mxu0
    %v827 = vmax.f32 %v824, 0.0
    %v828 = vld [vmem:[%s6] sm:$0xff]
    %v829 = vld [vmem:[%s6 + $0x8] sm:$0xff]
    %v830 = vld [vmem:[%s6 + $0x10] sm:$0xff]
    %v831 = vld [vmem:[%s6 + $0x18] sm:$0xff]
    %v832 = vld [vmem:[%s6 + $0x20] sm:$0xff]
    %v833 = vld [vmem:[%s6 + $0x28] sm:$0xff]
    %v834 = vld [vmem:[%s6 + $0x30] sm:$0xff]
    %v835 = vld [vmem:[%s6 + $0x38] sm:$0xff]
    %v836 = vld [vmem:[%s6 + $0x40] sm:$0xff]
    %v837 = vld [vmem:[%s6 + $0x48] sm:$0xff]
    %v838 = vld [vmem:[%s6 + $0x50] sm:$0xff]
    %v839 = vld [vmem:[%s6 + $0x58] sm:$0xff]
    %v840 = vld [vmem:[%s6 + $0x60] sm:$0xff]
    %v841 = vld [vmem:[%s6 + $0x68] sm:$0xff]
    %v842 = vld [vmem:[%s6 + $0x70] sm:$0xff]
    %v843 = vld [vmem:[%s6 + $0x78] sm:$0xff]
    %v844 = vld [vmem:[%s7] sm:$0x1]
    %v846 = vperm.slane %v844, 0
    %848 = vmatpush.msra.mxu0 %v843
    %849 = vmatpush.msra.mxu0 %v842
    %850 = vmatpush.msra.mxu0 %v841
    %851 = vmatpush.msra.mxu0 %v840
    %852 = vmatpush.msra.mxu0 %v839
    %853 = vmatpush.msra.mxu0 %v838
    %854 = vmatpush.msra.mxu0 %v837
    %855 = vmatpush.msra.mxu0 %v836
    %856 = vmatpush.msra.mxu0 %v835
    %857 = vmatpush.msra.mxu0 %v834
    %858 = vmatpush.msra.mxu0 %v833
    %859 = vmatpush.msra.mxu0 %v832
    %860 = vmatpush.msra.mxu0 %v831
    %861 = vmatpush.msra.mxu0 %v830
    %862 = vmatpush.msra.mxu0 %v829
    %863 = vmatpush.msra.mxu0 %v828
    %864 = vmatmul.f32.gmra.mxu0 %v827
    %v865 = vpop.f32.mrf.mxu0
    %v866 = vadd.f32 %v846, %v865
    %867 = vdwg.mxu0
    %v868 = vsub.f32 0.0, %v866
    %v869 = vmul.f32 %v868, 1.442695
    %v870 = vpow.pop %v869
    %v871 = vadd.f32 %v870, 1.0
    %v872 = vrcp.pop %v871
    %v873 = vmul.f32 %v871, %v872
    %v874 = vsub.f32 1.0, %v873
    %v875 = vmul.f32 %v872, %v874
    %v876 = vadd.f32 %v872, %v875
    %vm877 = vweird.f32 %v871
    %vm878 = vweird.f32 %v872
    %vm879 = vmor %vm877, %vm878
    %v880 = vsel %vm879, %v872, %v876
    %v881 = vand.u32 2147483647, %v871
    %vm882 = vcmp.eq.f32.partialorder %v881, 8.507059e+37
    %v883 = vand.u32 %v871, 2147483648
    %v884 = vor.u32 1.1754944e-38, %v883
    %v885 = vsel %vm882, %v884, %v880
    %vm886 = vcmask 25600
    %887 = vst.msk [vmem:[#allocation5] sm:$0x3] %vm886, %v885
    // Predicated region
    $region38: #{tpu_custom_call.1} parent=1 // pred_check
      _
    $region39: #{tpu_custom_call.1} parent=1 // pred_check_branch
      %889 = sbr.rel (0) target = $region41
    $region40: #{tpu_custom_call.1} parent=1 // pred_region
      %891 = vsyncadd [#allocation4], 0
      %s893 = sshll.u32 [#allocation5], 4
      %s894 = int_to_ptr.vmem [resolvable:$true] %s893
      %s895 = sshll.u32 %s8, 4
      %s896 = int_to_ptr.hbm [resolvable:$true] %s895
      %898 = dma.vmem_to_hbm [thread:$0]  %s894, 32, %s896, [#allocation4]
    $region41: #{tpu_custom_call.1} parent=1 // pred_fallthru
      _
    // Predicated region
    $region42: #{tpu_custom_call.1} parent=1 // pred_check
      _
    $region43: #{tpu_custom_call.1} parent=1 // pred_check_branch
      %900 = sbr.rel (0) target = $region45
    $region44: #{tpu_custom_call.1} parent=1 // pred_region
      %902 = dma.done [#allocation4], 32
    $region45: #{tpu_custom_call.1} parent=1 // pred_fallthru
      _
    %903 = vsyncpa [#allocation3], 1
    %904 = vsyncpa [#allocation4], 1

</llo_original>
